<compile_context>
chip_gen: v5e
topology: v5e:2x2
jax: 0.10.0
libtpu: 0.0.40
codegen_flags: <defaults>
</compile_context>

<pallas_src>
import jax
import jax.numpy as jnp
from jax.experimental import pallas as pl
from jax.experimental.pallas import tpu as pltpu


def conv1x1_kernel(x_ref, w_ref, b_ref, o_ref):
    # x_ref: (M, K) f32   w_ref: (K, N) bf16   b_ref: (1, N) f32   o_ref: (M, N) f32
    x_bf = x_ref[...].astype(jnp.bfloat16)           # tiny (M*K elems), free on VPU
    acc = jnp.dot(x_bf, w_ref[...], preferred_element_type=jnp.float32)
    o_ref[...] = (acc + b_ref[...]).astype(o_ref.dtype)


def prepare_conv1x1_params(weight, bias):
    """One-time parameter layout conversion. Call once, reuse across steps.

    weight: (C_out, C_in, 1, 1) f32  ->  (C_in, C_out) bf16
    bias:   (C_out,) f32             ->  (1, C_out) f32
    """
    C_out, C_in = weight.shape[0], weight.shape[1]
    w_mat = jnp.asarray(weight.reshape(C_out, C_in).T, dtype=jnp.bfloat16)
    b_mat = jnp.asarray(bias, dtype=jnp.float32).reshape(1, C_out)
    return w_mat, b_mat


def conv2d_1x1(x_nchw, w_mat, b_mat):
    """1x1 conv, stride 1, with bias, using pre-laid-out params.

    x_nchw: (N, C_in, H, W) f32
    w_mat:  (C_in, C_out) bf16   (from prepare_conv1x1_params)
    b_mat:  (1, C_out) f32
    returns (N, C_out, H, W) f32
    """
    N, C_in, H, W = x_nchw.shape
    C_out = w_mat.shape[1]
    M = N * H * W

    # Channels-last matrix view of the activation; at (1, 784, 1, 1) this is a
    # pure reshape (no data movement).
    x_mat = jnp.transpose(x_nchw, (0, 2, 3, 1)).reshape(M, C_in)

    cost = pl.CostEstimate(
        flops=2 * M * C_in * C_out,
        transcendentals=0,
        bytes_accessed=M * C_in * 4 + C_in * C_out * 2 + C_out * 4 + M * C_out * 4,
    )

    out_mat = pl.pallas_call(
        conv1x1_kernel,
        out_shape=jax.ShapeDtypeStruct((M, C_out), jnp.float32),
        # Full-array blocks (no grid, no padding): the (8,128) divisibility
        # rule is waived when the block dim equals the full array dim.
        in_specs=[
            pl.BlockSpec(memory_space=pltpu.MemorySpace.VMEM),
            pl.BlockSpec(memory_space=pltpu.MemorySpace.VMEM),
            pl.BlockSpec(memory_space=pltpu.MemorySpace.VMEM),
        ],
        out_specs=pl.BlockSpec(memory_space=pltpu.MemorySpace.VMEM),
        cost_estimate=cost,
        compiler_params=pltpu.CompilerParams(vmem_limit_bytes=2 * 1024 * 1024),
    )(x_mat, w_mat, b_mat)

    out = out_mat.reshape(N, H, W, C_out)
    return jnp.transpose(out, (0, 3, 1, 2)).astype(x_nchw.dtype)


if __name__ == "__main__":
    key = jax.random.PRNGKey(0)
    k_x, k_w, k_b = jax.random.split(key, 3)

    C_in, C_out = 784, 196
    # Input matches the module: [1, 784, 1, 1]
    x = jax.random.normal(k_x, (1, C_in, 1, 1), dtype=jnp.float32)

    # Deterministic parameter init (PyTorch-style uniform bounds for Conv2d).
    fan_in = C_in * 1 * 1
    bound = 1.0 / (fan_in ** 0.5)
    weight = jax.random.uniform(
        k_w, (C_out, C_in, 1, 1), minval=-bound, maxval=bound, dtype=jnp.float32
    )
    bias = jax.random.uniform(
        k_b, (C_out,), minval=-bound, maxval=bound, dtype=jnp.float32
    )

    # One-time parameter layout prep (hoisted out of the per-call path).
    w_mat, b_mat = prepare_conv1x1_params(weight, bias)
    w_mat, b_mat = jax.block_until_ready((w_mat, b_mat))

    conv_fn = jax.jit(conv2d_1x1)
    out = conv_fn(x, w_mat, b_mat)
    out = jax.block_until_ready(out)
    assert out.shape == (1, C_out, 1, 1), out.shape

    # Exact-numerics reference (same bf16-cast operands, f32 accumulation).
    x_bf = x.reshape(1, C_in).astype(jnp.bfloat16)
    w_bf = weight.reshape(C_out, C_in).T.astype(jnp.bfloat16)
    ref_bf = (
        jnp.dot(x_bf, w_bf, preferred_element_type=jnp.float32) + bias.reshape(1, C_out)
    ).reshape(1, C_out, 1, 1)
    assert jnp.allclose(out, ref_bf, atol=1e-5, rtol=1e-5)

    # Loose semantic check against the full-f32 reference (bf16 rounding only).
    ref_f32 = (
        jnp.einsum("nchw,oc->nohw", x, weight.reshape(C_out, C_in))
        + bias.reshape(1, C_out, 1, 1)
    )
    assert jnp.allclose(out, ref_f32, atol=5e-2, rtol=5e-2)

    print("KERNEL_OK")
</pallas_src>

<mosaic_0001>
module attributes {stable_mosaic.version = 11 : i64} {
  func.func @conv1x1_kernel(%arg0: memref<1x784xf32, #tpu.memory_space<vmem>>, %arg1: memref<784x196xbf16, #tpu.memory_space<vmem>>, %arg2: memref<1x196xf32, #tpu.memory_space<vmem>>, %arg3: memref<1x196xf32, #tpu.memory_space<vmem>>) attributes {dimension_semantics = [], scalar_prefetch = 0 : i64, scratch_operands = 0 : i64, tpu.core_type = #tpu.core_type<tc>} {
    %c0 = arith.constant 0 : index
    %c0_0 = arith.constant 0 : index
    %0 = vector.load %arg0[%c0, %c0_0] : memref<1x784xf32, #tpu.memory_space<vmem>>, vector<1x784xf32>
    %1 = arith.truncf %0 : vector<1x784xf32> to vector<1x784xbf16>
    %c0_1 = arith.constant 0 : index
    %c0_2 = arith.constant 0 : index
    %2 = vector.load %arg1[%c0_1, %c0_2] : memref<784x196xbf16, #tpu.memory_space<vmem>>, vector<784x196xbf16>
    %cst = arith.constant dense<0.000000e+00> : vector<1x196xf32>
    %3 = tpu.matmul %1, %2, %cst {dimension_numbers = #tpu.dot_dimension_numbers<[1], [0], [0], [1], [0, 0, 1, 1], [], []>} : vector<1x784xbf16>, vector<784x196xbf16>, vector<1x196xf32> -> vector<1x196xf32>
    %c0_3 = arith.constant 0 : index
    %c0_4 = arith.constant 0 : index
    %4 = vector.load %arg2[%c0_3, %c0_4] : memref<1x196xf32, #tpu.memory_space<vmem>>, vector<1x196xf32>
    %5 = arith.addf %3, %4 : vector<1x196xf32>
    %c0_5 = arith.constant 0 : index
    %c0_6 = arith.constant 0 : index
    %6 = vector.load %arg3[%c0_5, %c0_6] : memref<1x196xf32, #tpu.memory_space<vmem>>, vector<1x196xf32>
    tpu.vector_store %arg3[%c0_5, %c0_6], %5 {strides = array<i32>} : memref<1x196xf32, #tpu.memory_space<vmem>>, vector<1x196xf32>,
    return
  }
}

</mosaic_0001>

<llo_original>
// kernel: conv2d_1x1.1
$region0: #{conv2d_1x1.1}
  #allocation0 [shape = 'u32[]', space=smem, size = 0x4, offset = 0x4, fixed_abs, tag = 'smem constant byte address 0x4 - core index']
  #allocation1 [shape = 'u32[72,128]{1,0:T(1,128)}', space=vmem, size = 0x9000, scoped, tag = 'internal scratch']
  %s0 = inlined_call_operand.vmem [shape: f32[1,784], index: 0, kind: input, shape index: {}]
  %s1 = inlined_call_operand.vmem [shape: bf16[784,196], index: 1, kind: input, shape index: {}]
  %s2 = inlined_call_operand.vmem [shape: f32[1,196], index: 2, kind: input, shape index: {}]
  %s3 = inlined_call_operand.hbm [shape: f32[1,196], index: 3, kind: output, shape index: {}]
  %s4 = sld [smem:[#allocation0]]
  $region22: #{conv2d_1x1.1} parent=0
    _
  %s6 = ssub.s32 1, %s4
  %s7 = scalar_select 0, %s6, %s4
  $region1: #{conv2d_1x1.1} parent=0
    #allocation2 [shape = 'u8[1024]{0}', space=vmem, size = 0x400, scoped, tag = 'output window, operand 0, single buffered']
    #allocation3 [shape = 's32[1]{0}', space=sflag, size = 0x4, scoped, tag = 'scoped memory for conv2d_1x1.1']
    %8 = vsyncpa [#allocation3], 0
    // Predicated region
    $region2: #{conv2d_1x1.1} parent=1 // pred_check
      _
    $region3: #{conv2d_1x1.1} parent=1 // pred_check_branch
      %10 = sbr.rel (0) target = $region5
    $region4: #{conv2d_1x1.1} parent=1 // pred_region
      _
    $region5: #{conv2d_1x1.1} parent=1 // pred_fallthru
      _
    // Predicated region
    $region6: #{conv2d_1x1.1} parent=1 // pred_check
      _
    $region7: #{conv2d_1x1.1} parent=1 // pred_check_branch
      %12 = sbr.rel (0) target = $region9
    $region8: #{conv2d_1x1.1} parent=1 // pred_region
      _
    $region9: #{conv2d_1x1.1} parent=1 // pred_fallthru
      _
    // Predicated region
    $region10: #{conv2d_1x1.1} parent=1 // pred_check
      _
    $region11: #{conv2d_1x1.1} parent=1 // pred_check_branch
      %14 = sbr.rel (0) target = $region13
    $region12: #{conv2d_1x1.1} parent=1 // pred_region
      _
    $region13: #{conv2d_1x1.1} parent=1 // pred_fallthru
      _
    %v16 = vld [vmem:[%s0] sm:$0x7f]
    %v18 = vperm.slane %v16, 0
    %v19 = vperm.slane %v16, 1
    %v20 = vperm.slane %v16, 2
    %v21 = vperm.slane %v16, 3
    %v22 = vperm.slane %v16, 4
    %v23 = vperm.slane %v16, 5
    %v24 = vperm.slane %v16, 6
    %v32 = vpack.c.bf16 %v18, %v18
    %v33 = vpack.c.bf16 %v19, %v19
    %v34 = vpack.c.bf16 %v20, %v20
    %v35 = vpack.c.bf16 %v21, %v21
    %v36 = vpack.c.bf16 %v22, %v22
    %v37 = vpack.c.bf16 %v23, %v23
    %v38 = vpack.c.bf16 %v24, %v24
    %v39 = vld [vmem:[%s1] sm:$0xff]
    %v40 = vld [vmem:[%s1 + $0x8] sm:$0xff]
    %v41 = vld [vmem:[%s1 + $0x10] sm:$0xff]
    %v42 = vld [vmem:[%s1 + $0x18] sm:$0xff]
    %v43 = vld [vmem:[%s1 + $0x20] sm:$0xff]
    %v44 = vld [vmem:[%s1 + $0x28] sm:$0xff]
    %v45 = vld [vmem:[%s1 + $0x30] sm:$0xff]
    %v46 = vld [vmem:[%s1 + $0x38] sm:$0xff]
    %v47 = vld [vmem:[%s1 + $0x40] sm:$0xff]
    %v48 = vld [vmem:[%s1 + $0x48] sm:$0xff]
    %v49 = vld [vmem:[%s1 + $0x50] sm:$0xff]
    %v50 = vld [vmem:[%s1 + $0x58] sm:$0xff]
    %v51 = vld [vmem:[%s1 + $0x60] sm:$0xff]
    %v52 = vld [vmem:[%s1 + $0x68] sm:$0xff]
    %v53 = vld [vmem:[%s1 + $0x70] sm:$0xff]
    %v54 = vld [vmem:[%s1 + $0x78] sm:$0xff]
    %v55 = vld [vmem:[%s1 + $0x80] sm:$0xff]
    %v56 = vld [vmem:[%s1 + $0x88] sm:$0xff]
    %v57 = vld [vmem:[%s1 + $0x90] sm:$0xff]
    %v58 = vld [vmem:[%s1 + $0x98] sm:$0xff]
    %v59 = vld [vmem:[%s1 + $0xa0] sm:$0xff]
    %v60 = vld [vmem:[%s1 + $0xa8] sm:$0xff]
    %v61 = vld [vmem:[%s1 + $0xb0] sm:$0xff]
    %v62 = vld [vmem:[%s1 + $0xb8] sm:$0xff]
    %v63 = vld [vmem:[%s1 + $0xc0] sm:$0xff]
    %v64 = vld [vmem:[%s1 + $0xc8] sm:$0xff]
    %v65 = vld [vmem:[%s1 + $0xd0] sm:$0xff]
    %v66 = vld [vmem:[%s1 + $0xd8] sm:$0xff]
    %v67 = vld [vmem:[%s1 + $0xe0] sm:$0xff]
    %v68 = vld [vmem:[%s1 + $0xe8] sm:$0xff]
    %v69 = vld [vmem:[%s1 + $0xf0] sm:$0xff]
    %v70 = vld [vmem:[%s1 + $0xf8] sm:$0xff]
    %v71 = vld [vmem:[%s1 + $0x100] sm:$0xff]
    %v72 = vld [vmem:[%s1 + $0x108] sm:$0xff]
    %v73 = vld [vmem:[%s1 + $0x110] sm:$0xff]
    %v74 = vld [vmem:[%s1 + $0x118] sm:$0xff]
    %v75 = vld [vmem:[%s1 + $0x120] sm:$0xff]
    %v76 = vld [vmem:[%s1 + $0x128] sm:$0xff]
    %v77 = vld [vmem:[%s1 + $0x130] sm:$0xff]
    %v78 = vld [vmem:[%s1 + $0x138] sm:$0xff]
    %v79 = vld [vmem:[%s1 + $0x140] sm:$0xff]
    %v80 = vld [vmem:[%s1 + $0x148] sm:$0xff]
    %v81 = vld [vmem:[%s1 + $0x150] sm:$0xff]
    %v82 = vld [vmem:[%s1 + $0x158] sm:$0xff]
    %v83 = vld [vmem:[%s1 + $0x160] sm:$0xff]
    %v84 = vld [vmem:[%s1 + $0x168] sm:$0xff]
    %v85 = vld [vmem:[%s1 + $0x170] sm:$0xff]
    %v86 = vld [vmem:[%s1 + $0x178] sm:$0xff]
    %v87 = vld [vmem:[%s1 + $0x180] sm:$0xff]
    %v88 = vld [vmem:[%s1 + $0x188] sm:$0xff]
    %v89 = vld [vmem:[%s1 + $0x190] sm:$0xff]
    %v90 = vld [vmem:[%s1 + $0x198] sm:$0xff]
    %v91 = vld [vmem:[%s1 + $0x1a0] sm:$0xff]
    %v92 = vld [vmem:[%s1 + $0x1a8] sm:$0xff]
    %v93 = vld [vmem:[%s1 + $0x1b0] sm:$0xff]
    %v94 = vld [vmem:[%s1 + $0x1b8] sm:$0xff]
    %v95 = vld [vmem:[%s1 + $0x1c0] sm:$0xff]
    %v96 = vld [vmem:[%s1 + $0x1c8] sm:$0xff]
    %v97 = vld [vmem:[%s1 + $0x1d0] sm:$0xff]
    %v98 = vld [vmem:[%s1 + $0x1d8] sm:$0xff]
    %v99 = vld [vmem:[%s1 + $0x1e0] sm:$0xff]
    %v100 = vld [vmem:[%s1 + $0x1e8] sm:$0xff]
    %v101 = vld [vmem:[%s1 + $0x1f0] sm:$0xff]
    %v102 = vld [vmem:[%s1 + $0x1f8] sm:$0xff]
    %v103 = vld [vmem:[%s1 + $0x200] sm:$0xff]
    %v104 = vld [vmem:[%s1 + $0x208] sm:$0xff]
    %v105 = vld [vmem:[%s1 + $0x210] sm:$0xff]
    %v106 = vld [vmem:[%s1 + $0x218] sm:$0xff]
    %v107 = vld [vmem:[%s1 + $0x220] sm:$0xff]
    %v108 = vld [vmem:[%s1 + $0x228] sm:$0xff]
    %v109 = vld [vmem:[%s1 + $0x230] sm:$0xff]
    %v110 = vld [vmem:[%s1 + $0x238] sm:$0xff]
    %v111 = vld [vmem:[%s1 + $0x240] sm:$0xff]
    %v112 = vld [vmem:[%s1 + $0x248] sm:$0xff]
    %v113 = vld [vmem:[%s1 + $0x250] sm:$0xff]
    %v114 = vld [vmem:[%s1 + $0x258] sm:$0xff]
    %v115 = vld [vmem:[%s1 + $0x260] sm:$0xff]
    %v116 = vld [vmem:[%s1 + $0x268] sm:$0xff]
    %v117 = vld [vmem:[%s1 + $0x270] sm:$0xff]
    %v118 = vld [vmem:[%s1 + $0x278] sm:$0xff]
    %v119 = vld [vmem:[%s1 + $0x280] sm:$0xff]
    %v120 = vld [vmem:[%s1 + $0x288] sm:$0xff]
    %v121 = vld [vmem:[%s1 + $0x290] sm:$0xff]
    %v122 = vld [vmem:[%s1 + $0x298] sm:$0xff]
    %v123 = vld [vmem:[%s1 + $0x2a0] sm:$0xff]
    %v124 = vld [vmem:[%s1 + $0x2a8] sm:$0xff]
    %v125 = vld [vmem:[%s1 + $0x2b0] sm:$0xff]
    %v126 = vld [vmem:[%s1 + $0x2b8] sm:$0xff]
    %v127 = vld [vmem:[%s1 + $0x2c0] sm:$0xff]
    %v128 = vld [vmem:[%s1 + $0x2c8] sm:$0xff]
    %v129 = vld [vmem:[%s1 + $0x2d0] sm:$0xff]
    %v130 = vld [vmem:[%s1 + $0x2d8] sm:$0xff]
    %v131 = vld [vmem:[%s1 + $0x2e0] sm:$0xff]
    %v132 = vld [vmem:[%s1 + $0x2e8] sm:$0xff]
    %v133 = vld [vmem:[%s1 + $0x2f0] sm:$0xff]
    %v134 = vld [vmem:[%s1 + $0x2f8] sm:$0xff]
    %v135 = vld [vmem:[%s1 + $0x300] sm:$0xff]
    %v136 = vld [vmem:[%s1 + $0x308] sm:$0xff]
    %v137 = vld [vmem:[%s2] sm:$0x3]
    %v236 = vunpack.c.l.b16 %v39
    %v237 = vunpack.c.h.b16 %v39
    %v238 = vunpack.c.l.b16 %v40
    %v239 = vunpack.c.h.b16 %v40
    %v240 = vunpack.c.l.b16 %v41
    %v241 = vunpack.c.h.b16 %v41
    %v242 = vunpack.c.l.b16 %v42
    %v243 = vunpack.c.h.b16 %v42
    %v244 = vunpack.c.l.b16 %v43
    %v245 = vunpack.c.h.b16 %v43
    %v246 = vunpack.c.l.b16 %v44
    %v247 = vunpack.c.h.b16 %v44
    %v248 = vunpack.c.l.b16 %v45
    %v249 = vunpack.c.h.b16 %v45
    %v250 = vunpack.c.l.b16 %v46
    %v251 = vunpack.c.h.b16 %v46
    %v252 = vunpack.c.l.b16 %v47
    %v253 = vunpack.c.h.b16 %v47
    %v254 = vunpack.c.l.b16 %v48
    %v255 = vunpack.c.h.b16 %v48
    %v256 = vunpack.c.l.b16 %v49
    %v257 = vunpack.c.h.b16 %v49
    %v258 = vunpack.c.l.b16 %v50
    %v259 = vunpack.c.h.b16 %v50
    %v260 = vunpack.c.l.b16 %v51
    %v261 = vunpack.c.h.b16 %v51
    %v262 = vunpack.c.l.b16 %v52
    %v263 = vunpack.c.h.b16 %v52
    %v264 = vunpack.c.l.b16 %v53
    %v265 = vunpack.c.h.b16 %v53
    %v266 = vunpack.c.l.b16 %v54
    %v267 = vunpack.c.h.b16 %v54
    %v268 = vunpack.c.l.b16 %v55
    %v269 = vunpack.c.h.b16 %v55
    %v270 = vunpack.c.l.b16 %v56
    %v271 = vunpack.c.h.b16 %v56
    %v272 = vunpack.c.l.b16 %v57
    %v273 = vunpack.c.h.b16 %v57
    %v274 = vunpack.c.l.b16 %v58
    %v275 = vunpack.c.h.b16 %v58
    %v276 = vunpack.c.l.b16 %v59
    %v277 = vunpack.c.h.b16 %v59
    %v278 = vunpack.c.l.b16 %v60
    %v279 = vunpack.c.h.b16 %v60
    %v280 = vunpack.c.l.b16 %v61
    %v281 = vunpack.c.h.b16 %v61
    %v282 = vunpack.c.l.b16 %v62
    %v283 = vunpack.c.h.b16 %v62
    %v284 = vunpack.c.l.b16 %v63
    %v285 = vunpack.c.h.b16 %v63
    %v286 = vunpack.c.l.b16 %v64
    %v287 = vunpack.c.h.b16 %v64
    %v288 = vunpack.c.l.b16 %v65
    %v289 = vunpack.c.h.b16 %v65
    %v290 = vunpack.c.l.b16 %v66
    %v291 = vunpack.c.h.b16 %v66
    %v292 = vunpack.c.l.b16 %v67
    %v293 = vunpack.c.h.b16 %v67
    %v294 = vunpack.c.l.b16 %v68
    %v295 = vunpack.c.h.b16 %v68
    %v296 = vunpack.c.l.b16 %v69
    %v297 = vunpack.c.h.b16 %v69
    %v298 = vunpack.c.l.b16 %v70
    %v299 = vunpack.c.h.b16 %v70
    %v300 = vunpack.c.l.b16 %v71
    %v301 = vunpack.c.h.b16 %v71
    %v302 = vunpack.c.l.b16 %v72
    %v303 = vunpack.c.h.b16 %v72
    %v304 = vunpack.c.l.b16 %v73
    %v305 = vunpack.c.h.b16 %v73
    %v306 = vunpack.c.l.b16 %v74
    %v307 = vunpack.c.h.b16 %v74
    %v308 = vunpack.c.l.b16 %v75
    %v309 = vunpack.c.h.b16 %v75
    %v310 = vunpack.c.l.b16 %v76
    %v311 = vunpack.c.h.b16 %v76
    %v312 = vunpack.c.l.b16 %v77
    %v313 = vunpack.c.h.b16 %v77
    %v314 = vunpack.c.l.b16 %v78
    %v315 = vunpack.c.h.b16 %v78
    %v316 = vunpack.c.l.b16 %v79
    %v317 = vunpack.c.h.b16 %v79
    %v318 = vunpack.c.l.b16 %v80
    %v319 = vunpack.c.h.b16 %v80
    %v320 = vunpack.c.l.b16 %v81
    %v321 = vunpack.c.h.b16 %v81
    %v322 = vunpack.c.l.b16 %v82
    %v323 = vunpack.c.h.b16 %v82
    %v324 = vunpack.c.l.b16 %v83
    %v325 = vunpack.c.h.b16 %v83
    %v326 = vunpack.c.l.b16 %v84
    %v327 = vunpack.c.h.b16 %v84
    %v328 = vunpack.c.l.b16 %v85
    %v329 = vunpack.c.h.b16 %v85
    %v330 = vunpack.c.l.b16 %v86
    %v331 = vunpack.c.h.b16 %v86
    %v332 = vunpack.c.l.b16 %v87
    %v333 = vunpack.c.h.b16 %v87
    %v334 = vunpack.c.l.b16 %v88
    %v335 = vunpack.c.h.b16 %v88
    %v336 = vunpack.c.l.b16 %v89
    %v337 = vunpack.c.h.b16 %v89
    %v338 = vunpack.c.l.b16 %v90
    %v339 = vunpack.c.h.b16 %v90
    %v340 = vunpack.c.l.b16 %v91
    %v341 = vunpack.c.h.b16 %v91
    %v342 = vunpack.c.l.b16 %v92
    %v343 = vunpack.c.h.b16 %v92
    %v344 = vunpack.c.l.b16 %v93
    %v345 = vunpack.c.h.b16 %v93
    %v346 = vunpack.c.l.b16 %v94
    %v347 = vunpack.c.h.b16 %v94
    %v348 = vunpack.c.l.b16 %v95
    %v349 = vunpack.c.h.b16 %v95
    %v350 = vunpack.c.l.b16 %v96
    %v351 = vunpack.c.h.b16 %v96
    %v352 = vunpack.c.l.b16 %v97
    %v353 = vunpack.c.h.b16 %v97
    %v354 = vunpack.c.l.b16 %v98
    %v355 = vunpack.c.h.b16 %v98
    %v356 = vunpack.c.l.b16 %v99
    %v357 = vunpack.c.h.b16 %v99
    %v358 = vunpack.c.l.b16 %v100
    %v359 = vunpack.c.h.b16 %v100
    %v360 = vunpack.c.l.b16 %v101
    %v361 = vunpack.c.h.b16 %v101
    %v362 = vunpack.c.l.b16 %v102
    %v363 = vunpack.c.h.b16 %v102
    %v364 = vunpack.c.l.b16 %v103
    %v365 = vunpack.c.h.b16 %v103
    %v366 = vunpack.c.l.b16 %v104
    %v367 = vunpack.c.h.b16 %v104
    %v368 = vunpack.c.l.b16 %v105
    %v369 = vunpack.c.h.b16 %v105
    %v370 = vunpack.c.l.b16 %v106
    %v371 = vunpack.c.h.b16 %v106
    %v372 = vunpack.c.l.b16 %v107
    %v373 = vunpack.c.h.b16 %v107
    %v374 = vunpack.c.l.b16 %v108
    %v375 = vunpack.c.h.b16 %v108
    %v376 = vunpack.c.l.b16 %v109
    %v377 = vunpack.c.h.b16 %v109
    %v378 = vunpack.c.l.b16 %v110
    %v379 = vunpack.c.h.b16 %v110
    %v380 = vunpack.c.l.b16 %v111
    %v381 = vunpack.c.h.b16 %v111
    %v382 = vunpack.c.l.b16 %v112
    %v383 = vunpack.c.h.b16 %v112
    %v384 = vunpack.c.l.b16 %v113
    %v385 = vunpack.c.h.b16 %v113
    %v386 = vunpack.c.l.b16 %v114
    %v387 = vunpack.c.h.b16 %v114
    %v388 = vunpack.c.l.b16 %v115
    %v389 = vunpack.c.h.b16 %v115
    %v390 = vunpack.c.l.b16 %v116
    %v391 = vunpack.c.h.b16 %v116
    %v392 = vunpack.c.l.b16 %v117
    %v393 = vunpack.c.h.b16 %v117
    %v394 = vunpack.c.l.b16 %v118
    %v395 = vunpack.c.h.b16 %v118
    %v396 = vunpack.c.l.b16 %v119
    %v397 = vunpack.c.h.b16 %v119
    %v398 = vunpack.c.l.b16 %v120
    %v399 = vunpack.c.h.b16 %v120
    %v400 = vunpack.c.l.b16 %v121
    %v401 = vunpack.c.h.b16 %v121
    %v402 = vunpack.c.l.b16 %v122
    %v403 = vunpack.c.h.b16 %v122
    %v404 = vunpack.c.l.b16 %v123
    %v405 = vunpack.c.h.b16 %v123
    %v406 = vunpack.c.l.b16 %v124
    %v407 = vunpack.c.h.b16 %v124
    %v408 = vunpack.c.l.b16 %v125
    %v409 = vunpack.c.h.b16 %v125
    %v410 = vunpack.c.l.b16 %v126
    %v411 = vunpack.c.h.b16 %v126
    %v412 = vunpack.c.l.b16 %v127
    %v413 = vunpack.c.h.b16 %v127
    %v414 = vunpack.c.l.b16 %v128
    %v415 = vunpack.c.h.b16 %v128
    %v416 = vunpack.c.l.b16 %v129
    %v417 = vunpack.c.h.b16 %v129
    %v418 = vunpack.c.l.b16 %v130
    %v419 = vunpack.c.h.b16 %v130
    %v420 = vunpack.c.l.b16 %v131
    %v421 = vunpack.c.h.b16 %v131
    %v422 = vunpack.c.l.b16 %v132
    %v423 = vunpack.c.h.b16 %v132
    %v424 = vunpack.c.l.b16 %v133
    %v425 = vunpack.c.h.b16 %v133
    %v426 = vunpack.c.l.b16 %v134
    %v427 = vunpack.c.h.b16 %v134
    %v428 = vunpack.c.l.b16 %v135
    %v429 = vunpack.c.h.b16 %v135
    %v430 = vunpack.c.l.b16 %v136
    %v431 = vunpack.c.h.b16 %v136
    %v432 = vpack.c.b16 %v238, %v236
    %v433 = vpack.c.b16 %v239, %v237
    %v434 = vpack.c.b16 %v242, %v240
    %v435 = vpack.c.b16 %v243, %v241
    %v436 = vpack.c.b16 %v246, %v244
    %v437 = vpack.c.b16 %v247, %v245
    %v438 = vpack.c.b16 %v250, %v248
    %v439 = vpack.c.b16 %v251, %v249
    %v440 = vpack.c.b16 %v254, %v252
    %v441 = vpack.c.b16 %v255, %v253
    %v442 = vpack.c.b16 %v258, %v256
    %v443 = vpack.c.b16 %v259, %v257
    %v444 = vpack.c.b16 %v262, %v260
    %v445 = vpack.c.b16 %v263, %v261
    %v446 = vpack.c.b16 %v266, %v264
    %v447 = vpack.c.b16 %v267, %v265
    %v448 = vpack.c.b16 %v270, %v268
    %v449 = vpack.c.b16 %v271, %v269
    %v450 = vpack.c.b16 %v274, %v272
    %v451 = vpack.c.b16 %v275, %v273
    %v452 = vpack.c.b16 %v278, %v276
    %v453 = vpack.c.b16 %v279, %v277
    %v454 = vpack.c.b16 %v282, %v280
    %v455 = vpack.c.b16 %v283, %v281
    %v456 = vpack.c.b16 %v286, %v284
    %v457 = vpack.c.b16 %v287, %v285
    %v458 = vpack.c.b16 %v290, %v288
    %v459 = vpack.c.b16 %v291, %v289
    %v460 = vpack.c.b16 %v294, %v292
    %v461 = vpack.c.b16 %v295, %v293
    %v462 = vpack.c.b16 %v298, %v296
    %v463 = vpack.c.b16 %v299, %v297
    %v464 = vpack.c.b16 %v302, %v300
    %v465 = vpack.c.b16 %v303, %v301
    %v466 = vpack.c.b16 %v306, %v304
    %v467 = vpack.c.b16 %v307, %v305
    %v468 = vpack.c.b16 %v310, %v308
    %v469 = vpack.c.b16 %v311, %v309
    %v470 = vpack.c.b16 %v314, %v312
    %v471 = vpack.c.b16 %v315, %v313
    %v472 = vpack.c.b16 %v318, %v316
    %v473 = vpack.c.b16 %v319, %v317
    %v474 = vpack.c.b16 %v322, %v320
    %v475 = vpack.c.b16 %v323, %v321
    %v476 = vpack.c.b16 %v326, %v324
    %v477 = vpack.c.b16 %v327, %v325
    %v478 = vpack.c.b16 %v330, %v328
    %v479 = vpack.c.b16 %v331, %v329
    %v480 = vpack.c.b16 %v334, %v332
    %v481 = vpack.c.b16 %v335, %v333
    %v482 = vpack.c.b16 %v338, %v336
    %v483 = vpack.c.b16 %v339, %v337
    %v484 = vpack.c.b16 %v342, %v340
    %v485 = vpack.c.b16 %v343, %v341
    %v486 = vpack.c.b16 %v346, %v344
    %v487 = vpack.c.b16 %v347, %v345
    %v488 = vpack.c.b16 %v350, %v348
    %v489 = vpack.c.b16 %v351, %v349
    %v490 = vpack.c.b16 %v354, %v352
    %v491 = vpack.c.b16 %v355, %v353
    %v492 = vpack.c.b16 %v358, %v356
    %v493 = vpack.c.b16 %v359, %v357
    %v494 = vpack.c.b16 %v362, %v360
    %v495 = vpack.c.b16 %v363, %v361
    %v496 = vpack.c.b16 %v366, %v364
    %v497 = vpack.c.b16 %v367, %v365
    %v498 = vpack.c.b16 %v370, %v368
    %v499 = vpack.c.b16 %v371, %v369
    %v500 = vpack.c.b16 %v374, %v372
    %v501 = vpack.c.b16 %v375, %v373
    %v502 = vpack.c.b16 %v378, %v376
    %v503 = vpack.c.b16 %v379, %v377
    %v504 = vpack.c.b16 %v382, %v380
    %v505 = vpack.c.b16 %v383, %v381
    %v506 = vpack.c.b16 %v386, %v384
    %v507 = vpack.c.b16 %v387, %v385
    %v508 = vpack.c.b16 %v390, %v388
    %v509 = vpack.c.b16 %v391, %v389
    %v510 = vpack.c.b16 %v394, %v392
    %v511 = vpack.c.b16 %v395, %v393
    %v512 = vpack.c.b16 %v398, %v396
    %v513 = vpack.c.b16 %v399, %v397
    %v514 = vpack.c.b16 %v402, %v400
    %v515 = vpack.c.b16 %v403, %v401
    %v516 = vpack.c.b16 %v406, %v404
    %v517 = vpack.c.b16 %v407, %v405
    %v518 = vpack.c.b16 %v410, %v408
    %v519 = vpack.c.b16 %v411, %v409
    %v520 = vpack.c.b16 %v414, %v412
    %v521 = vpack.c.b16 %v415, %v413
    %v522 = vpack.c.b16 %v418, %v416
    %v523 = vpack.c.b16 %v419, %v417
    %v524 = vpack.c.b16 %v422, %v420
    %v525 = vpack.c.b16 %v423, %v421
    %v526 = vpack.c.b16 %v426, %v424
    %v527 = vpack.c.b16 %v427, %v425
    %v528 = vpack.c.b16 %v430, %v428
    %v529 = vpack.c.b16 %v431, %v429
    %v629 = vperm.slane %v137, 0
    %v630 = vperm.slane %v137, 1
    %vm633 = vcmask 130048
    %v635 = vsel %vm633, %v38, 0
    %637 = vmatpush.bf16.msra.mxu0 %v446
    %638 = vmatpush.bf16.msra.mxu0 %v444
    %639 = vmatpush.bf16.msra.mxu0 %v442
    %640 = vmatpush.bf16.msra.mxu0 %v440
    %641 = vmatpush.bf16.msra.mxu0 %v438
    %642 = vmatpush.bf16.msra.mxu0 %v436
    %643 = vmatpush.bf16.msra.mxu0 %v434
    %644 = vmatpush.bf16.msra.mxu0 %v432
    %645 = vmatmul.bf16.gmra.mxu0 %v32
    %v646 = vpop.f32.mrf.mxu0
    %v647 = vadd.f32 %v629, %v646
    %v648 = vpop.f32.mrf.mxu0
    %649 = vdwg.mxu0
    %650 = vmatpush.bf16.msra.mxu0 %v462
    %651 = vmatpush.bf16.msra.mxu0 %v460
    %652 = vmatpush.bf16.msra.mxu0 %v458
    %653 = vmatpush.bf16.msra.mxu0 %v456
    %654 = vmatpush.bf16.msra.mxu0 %v454
    %655 = vmatpush.bf16.msra.mxu0 %v452
    %656 = vmatpush.bf16.msra.mxu0 %v450
    %657 = vmatpush.bf16.msra.mxu0 %v448
    %658 = vmatmul.bf16.gmra.mxu0 %v33
    %v659 = vpop.f32.mrf.mxu0
    %v660 = vadd.f32 %v647, %v659
    %v661 = vpop.f32.mrf.mxu0
    %662 = vdwg.mxu0
    %663 = vmatpush.bf16.msra.mxu0 %v478
    %664 = vmatpush.bf16.msra.mxu0 %v476
    %665 = vmatpush.bf16.msra.mxu0 %v474
    %666 = vmatpush.bf16.msra.mxu0 %v472
    %667 = vmatpush.bf16.msra.mxu0 %v470
    %668 = vmatpush.bf16.msra.mxu0 %v468
    %669 = vmatpush.bf16.msra.mxu0 %v466
    %670 = vmatpush.bf16.msra.mxu0 %v464
    %671 = vmatmul.bf16.gmra.mxu0 %v34
    %v672 = vpop.f32.mrf.mxu0
    %v673 = vadd.f32 %v660, %v672
    %v674 = vpop.f32.mrf.mxu0
    %675 = vdwg.mxu0
    %676 = vmatpush.bf16.msra.mxu0 %v494
    %677 = vmatpush.bf16.msra.mxu0 %v492
    %678 = vmatpush.bf16.msra.mxu0 %v490
    %679 = vmatpush.bf16.msra.mxu0 %v488
    %680 = vmatpush.bf16.msra.mxu0 %v486
    %681 = vmatpush.bf16.msra.mxu0 %v484
    %682 = vmatpush.bf16.msra.mxu0 %v482
    %683 = vmatpush.bf16.msra.mxu0 %v480
    %684 = vmatmul.bf16.gmra.mxu0 %v35
    %v685 = vpop.f32.mrf.mxu0
    %v686 = vadd.f32 %v673, %v685
    %v687 = vpop.f32.mrf.mxu0
    %688 = vdwg.mxu0
    %689 = vmatpush.bf16.msra.mxu0 %v510
    %690 = vmatpush.bf16.msra.mxu0 %v508
    %691 = vmatpush.bf16.msra.mxu0 %v506
    %692 = vmatpush.bf16.msra.mxu0 %v504
    %693 = vmatpush.bf16.msra.mxu0 %v502
    %694 = vmatpush.bf16.msra.mxu0 %v500
    %695 = vmatpush.bf16.msra.mxu0 %v498
    %696 = vmatpush.bf16.msra.mxu0 %v496
    %697 = vmatmul.bf16.gmra.mxu0 %v36
    %v698 = vpop.f32.mrf.mxu0
    %v699 = vadd.f32 %v686, %v698
    %v700 = vpop.f32.mrf.mxu0
    %701 = vdwg.mxu0
    %702 = vmatpush.bf16.msra.mxu0 %v526
    %703 = vmatpush.bf16.msra.mxu0 %v524
    %704 = vmatpush.bf16.msra.mxu0 %v522
    %705 = vmatpush.bf16.msra.mxu0 %v520
    %706 = vmatpush.bf16.msra.mxu0 %v518
    %707 = vmatpush.bf16.msra.mxu0 %v516
    %708 = vmatpush.bf16.msra.mxu0 %v514
    %709 = vmatpush.bf16.msra.mxu0 %v512
    %710 = vmatmul.bf16.gmra.mxu0 %v37
    %v711 = vpop.f32.mrf.mxu0
    %v712 = vadd.f32 %v699, %v711
    %v713 = vpop.f32.mrf.mxu0
    %714 = vdwg.mxu0
    %715 = vmatpush.bf16.msra.mxu0 0
    %716 = vmatpush.bf16.msra.mxu0 0
    %717 = vmatpush.bf16.msra.mxu0 0
    %718 = vmatpush.bf16.msra.mxu0 0
    %719 = vmatpush.bf16.msra.mxu0 0
    %720 = vmatpush.bf16.msra.mxu0 0
    %721 = vmatpush.bf16.msra.mxu0 0
    %722 = vmatpush.bf16.msra.mxu0 %v528
    %723 = vmatmul.bf16.gmra.mxu0 %v635
    %v724 = vpop.f32.mrf.mxu0
    %v725 = vadd.f32 %v712, %v724
    %v726 = vpop.f32.mrf.mxu0
    %727 = vdwg.mxu0
    %728 = vmatpush.bf16.msra.mxu0 %v447
    %729 = vmatpush.bf16.msra.mxu0 %v445
    %730 = vmatpush.bf16.msra.mxu0 %v443
    %731 = vmatpush.bf16.msra.mxu0 %v441
    %732 = vmatpush.bf16.msra.mxu0 %v439
    %733 = vmatpush.bf16.msra.mxu0 %v437
    %734 = vmatpush.bf16.msra.mxu0 %v435
    %735 = vmatpush.bf16.msra.mxu0 %v433
    %736 = vmatmul.bf16.gmra.mxu0 %v32
    %v737 = vpop.f32.mrf.mxu0
    %v738 = vadd.f32 %v630, %v737
    %v739 = vpop.f32.mrf.mxu0
    %740 = vdwg.mxu0
    %741 = vmatpush.bf16.msra.mxu0 %v463
    %742 = vmatpush.bf16.msra.mxu0 %v461
    %743 = vmatpush.bf16.msra.mxu0 %v459
    %744 = vmatpush.bf16.msra.mxu0 %v457
    %745 = vmatpush.bf16.msra.mxu0 %v455
    %746 = vmatpush.bf16.msra.mxu0 %v453
    %747 = vmatpush.bf16.msra.mxu0 %v451
    %748 = vmatpush.bf16.msra.mxu0 %v449
    %749 = vmatmul.bf16.gmra.mxu0 %v33
    %v750 = vpop.f32.mrf.mxu0
    %v751 = vadd.f32 %v738, %v750
    %v752 = vpop.f32.mrf.mxu0
    %753 = vdwg.mxu0
    %754 = vmatpush.bf16.msra.mxu0 %v479
    %755 = vmatpush.bf16.msra.mxu0 %v477
    %756 = vmatpush.bf16.msra.mxu0 %v475
    %757 = vmatpush.bf16.msra.mxu0 %v473
    %758 = vmatpush.bf16.msra.mxu0 %v471
    %759 = vmatpush.bf16.msra.mxu0 %v469
    %760 = vmatpush.bf16.msra.mxu0 %v467
    %761 = vmatpush.bf16.msra.mxu0 %v465
    %762 = vmatmul.bf16.gmra.mxu0 %v34
    %v763 = vpop.f32.mrf.mxu0
    %v764 = vadd.f32 %v751, %v763
    %v765 = vpop.f32.mrf.mxu0
    %766 = vdwg.mxu0
    %767 = vmatpush.bf16.msra.mxu0 %v495
    %768 = vmatpush.bf16.msra.mxu0 %v493
    %769 = vmatpush.bf16.msra.mxu0 %v491
    %770 = vmatpush.bf16.msra.mxu0 %v489
    %771 = vmatpush.bf16.msra.mxu0 %v487
    %772 = vmatpush.bf16.msra.mxu0 %v485
    %773 = vmatpush.bf16.msra.mxu0 %v483
    %774 = vmatpush.bf16.msra.mxu0 %v481
    %775 = vmatmul.bf16.gmra.mxu0 %v35
    %v776 = vpop.f32.mrf.mxu0
    %v777 = vadd.f32 %v764, %v776
    %v778 = vpop.f32.mrf.mxu0
    %779 = vdwg.mxu0
    %780 = vmatpush.bf16.msra.mxu0 %v511
    %781 = vmatpush.bf16.msra.mxu0 %v509
    %782 = vmatpush.bf16.msra.mxu0 %v507
    %783 = vmatpush.bf16.msra.mxu0 %v505
    %784 = vmatpush.bf16.msra.mxu0 %v503
    %785 = vmatpush.bf16.msra.mxu0 %v501
    %786 = vmatpush.bf16.msra.mxu0 %v499
    %787 = vmatpush.bf16.msra.mxu0 %v497
    %788 = vmatmul.bf16.gmra.mxu0 %v36
    %v789 = vpop.f32.mrf.mxu0
    %v790 = vadd.f32 %v777, %v789
    %v791 = vpop.f32.mrf.mxu0
    %792 = vdwg.mxu0
    %793 = vmatpush.bf16.msra.mxu0 %v527
    %794 = vmatpush.bf16.msra.mxu0 %v525
    %795 = vmatpush.bf16.msra.mxu0 %v523
    %796 = vmatpush.bf16.msra.mxu0 %v521
    %797 = vmatpush.bf16.msra.mxu0 %v519
    %798 = vmatpush.bf16.msra.mxu0 %v517
    %799 = vmatpush.bf16.msra.mxu0 %v515
    %800 = vmatpush.bf16.msra.mxu0 %v513
    %801 = vmatmul.bf16.gmra.mxu0 %v37
    %v802 = vpop.f32.mrf.mxu0
    %v803 = vadd.f32 %v790, %v802
    %v804 = vpop.f32.mrf.mxu0
    %805 = vdwg.mxu0
    %806 = vmatpush.bf16.msra.mxu0 0
    %807 = vmatpush.bf16.msra.mxu0 0
    %808 = vmatpush.bf16.msra.mxu0 0
    %809 = vmatpush.bf16.msra.mxu0 0
    %810 = vmatpush.bf16.msra.mxu0 0
    %811 = vmatpush.bf16.msra.mxu0 0
    %812 = vmatpush.bf16.msra.mxu0 0
    %813 = vmatpush.bf16.msra.mxu0 %v529
    %814 = vmatmul.bf16.gmra.mxu0 %v635
    %v815 = vpop.f32.mrf.mxu0
    %v816 = vadd.f32 %v803, %v815
    %v817 = vpop.f32.mrf.mxu0
    %818 = vdwg.mxu0
    %v821 = vrot.slane %v816, 7
    %vm822 = vcmask 1040384
    %v823 = vsel %vm822, %v725, %v821
    %v825 = vlaneseq
    %vm826 = vcmp.ge.s32.totalorder %v825, 0
    %vm827 = vcmp.lt.s32.totalorder %v825, 196
    %vm828 = vmand %vm826, %vm827
    %829 = vst.msk [vmem:[#allocation2] sm:$0x3] %vm828, %v823
    // Predicated region
    $region14: #{conv2d_1x1.1} parent=1 // pred_check
      _
    $region15: #{conv2d_1x1.1} parent=1 // pred_check_branch
      %831 = sbr.rel (0) target = $region17
    $region16: #{conv2d_1x1.1} parent=1 // pred_region
      %833 = vsyncadd [#allocation3], 0
      %s835 = sshll.u32 [#allocation2], 4
      %s836 = int_to_ptr.vmem [resolvable:$true] %s835
      %s837 = sshll.u32 %s3, 4
      %s838 = int_to_ptr.hbm [resolvable:$true] %s837
      %840 = dma.vmem_to_hbm [thread:$0]  %s836, 32, %s838, [#allocation3]
    $region17: #{conv2d_1x1.1} parent=1 // pred_fallthru
      _
    // Predicated region
    $region18: #{conv2d_1x1.1} parent=1 // pred_check
      _
    $region19: #{conv2d_1x1.1} parent=1 // pred_check_branch
      %842 = sbr.rel (0) target = $region21
    $region20: #{conv2d_1x1.1} parent=1 // pred_region
      %844 = dma.done [#allocation3], 32
    $region21: #{conv2d_1x1.1} parent=1 // pred_fallthru
      _
    %845 = vsyncpa [#allocation3], 1

</llo_original>
